<compile_context>
chip_gen: v7x
topology: tpu7x:2x2x1
jax: 0.10.0
libtpu: 0.0.40
codegen_flags: <defaults>
</compile_context>

<pallas_src>
import functools

import jax
import jax.numpy as jnp
from jax import lax
from jax.experimental import pallas as pl
from jax.experimental.pallas import tpu as pltpu


def _to_2tuple(v):
    return tuple(v) if isinstance(v, (tuple, list)) else (v, v)


def _round_up(x, m):
    return (x + m - 1) // m * m


def _num_tensorcores():
    """Best-effort count of TensorCores behind one Pallas device."""
    try:
        kind = jax.devices()[0].device_kind.lower()
    except Exception:
        return 1
    # v4 / v5p megacore and v7x expose 2 TensorCores; v5e / v6e have 1.
    if any(tag in kind for tag in ("v4", "v5p", "v7")):
        return 2
    return 1


@functools.lru_cache(maxsize=None)
def _check_patch_feature_order(C, kh, kw):
    """Exact check: conv_general_dilated_patches features are in (C, kh, kw) order."""
    x = jnp.arange(C * kh * kw, dtype=jnp.float32).reshape(1, C, kh, kw)
    p = lax.conv_general_dilated_patches(
        x, filter_shape=(kh, kw), window_strides=(kh, kw),
        padding=[(0, 0), (0, 0)],
        dimension_numbers=("NCHW", "OIHW", "NHWC"),
        precision=lax.Precision.HIGHEST)
    assert p.shape == (1, 1, 1, C * kh * kw)
    ok = bool(jnp.all(p.reshape(-1) == jnp.arange(C * kh * kw, dtype=jnp.float32)))
    if not ok:
        raise AssertionError(
            "conv_general_dilated_patches feature order is not (C, kh, kw); "
            "PatchEmbed weight packing must be updated.")
    return True


def _matmul_bias_kernel(x_ref, w_ref, b_ref, o_ref):
    # (tm, Kpad)bf16 @ (Kpad, Npad)bf16 -> f32 on the MXU, + f32 bias, cast, store.
    acc = jnp.dot(x_ref[...], w_ref[...], preferred_element_type=jnp.float32)
    o_ref[...] = (acc + b_ref[...]).astype(o_ref.dtype)


_VMEM_BUDGET = 24 * 1024 * 1024   # conservative: v7x scoped default ~32 MiB
_BUFFERED_SPECS_OK = None          # feature-detect pipeline_mode= once


def _choose_tm(M, K, N, out_bytes, max_tm):
    """Balanced, VMEM-safe M tiling with an even grid on multi-core chips."""
    # VMEM cap (worst case: 3-deep x/out buffers, double-buffered weight + bias).
    fixed = 2 * K * N * 2 + N * 4
    per_row = 3 * K * 2 + 3 * N * out_bytes
    tm_cap = max(8, (_VMEM_BUDGET - fixed) // per_row // 8 * 8)
    max_tm = max(8, min(max_tm, tm_cap))

    grid_m = pl.cdiv(M, max_tm)
    cores = _num_tensorcores()
    if cores > 1 and M > 8:
        # Even block count -> both TensorCores get identical work on v7x.
        grid_m = _round_up(grid_m, cores)
    tm = min(max_tm, _round_up(pl.cdiv(M, grid_m), 8))
    grid_m = pl.cdiv(M, tm)                     # keep every block non-empty
    return tm, grid_m


def _patch_matmul(patches, weight, bias, *, out_dtype=jnp.float32, max_tm=512):
    """patches: (M, Kpad) bf16, weight: (Kpad, Npad) bf16, bias: (1, Npad) f32."""
    global _BUFFERED_SPECS_OK
    M, K = patches.shape
    N = weight.shape[1]
    out_bytes = jnp.dtype(out_dtype).itemsize
    tm, grid_m = _choose_tm(M, K, N, out_bytes, max_tm)

    cost = pl.CostEstimate(
        flops=2 * M * K * N,
        transcendentals=0,
        bytes_accessed=M * K * 2 + K * N * 2 + N * 4 + M * N * out_bytes)

    def build(use_pipeline_mode):
        if use_pipeline_mode:
            in_specs = [
                # streaming token tile: 3-deep so next load + prev store overlap
                pl.BlockSpec((tm, K), lambda i: (i, 0),
                             pipeline_mode=pl.Buffered(3)),
                # resident operands (constant index_map): single buffer
                pl.BlockSpec((K, N), lambda i: (0, 0),
                             pipeline_mode=pl.Buffered(1)),
                pl.BlockSpec((1, N), lambda i: (0, 0),
                             pipeline_mode=pl.Buffered(1)),
            ]
            out_specs = pl.BlockSpec((tm, N), lambda i: (i, 0),
                                     pipeline_mode=pl.Buffered(3))
        else:
            in_specs = [
                pl.BlockSpec((tm, K), lambda i: (i, 0)),
                pl.BlockSpec((K, N), lambda i: (0, 0)),
                pl.BlockSpec((1, N), lambda i: (0, 0)),
            ]
            out_specs = pl.BlockSpec((tm, N), lambda i: (i, 0))
        return pl.pallas_call(
            _matmul_bias_kernel,
            out_shape=jax.ShapeDtypeStruct((M, N), out_dtype),
            grid=(grid_m,),
            in_specs=in_specs,
            out_specs=out_specs,
            cost_estimate=cost,
            compiler_params=pltpu.CompilerParams(
                dimension_semantics=("parallel",)),
        )

    if _BUFFERED_SPECS_OK is None:
        try:
            out = build(True)(patches, weight, bias)
            _BUFFERED_SPECS_OK = True
            return out
        except Exception:
            _BUFFERED_SPECS_OK = False
    return build(_BUFFERED_SPECS_OK)(patches, weight, bias)


class PatchEmbed:
    """JAX/Pallas port of mmpose PatchEmbed (forward semantics only)."""

    def __init__(self, img_size=224, patch_size=16, in_chans=3, embed_dim=768,
                 ratio=1, *, wkey, bkey, out_dtype=jnp.float32):
        img_size = _to_2tuple(img_size)
        patch_size = _to_2tuple(patch_size)
        self.img_size = img_size
        self.patch_size = patch_size
        self.in_chans = in_chans
        self.embed_dim = embed_dim
        self.patch_shape = (int(img_size[0] // patch_size[0] * ratio),
                            int(img_size[1] // patch_size[1] * ratio))
        self.origin_patch_shape = (int(img_size[0] // patch_size[0]),
                                   int(img_size[1] // patch_size[1]))
        self.num_patches = (img_size[1] // patch_size[1]
                            * (img_size[0] // patch_size[0]) * ratio ** 2)
        self.stride = patch_size[0] // ratio
        self.padding = 4 + 2 * (ratio // 2 - 1)
        # out_dtype=bf16 halves token writeback (the largest HBM stream) on
        # mem-bound v6e/v7x; default f32 matches the PyTorch module. Either
        # way the matmul is bf16 x bf16 with f32 accumulate + f32 bias.
        self.out_dtype = out_dtype

        # Deterministic synthetic parameters (Conv2d weight OIHW + bias), f32.
        self.weight = 0.02 * jax.random.normal(
            wkey, (embed_dim, in_chans, patch_size[0], patch_size[1]),
            jnp.float32)
        self.bias = 0.01 * jax.random.normal(bkey, (embed_dim,), jnp.float32)

        # Exact feature-order check (im2col must emit (C, kh, kw) to match
        # weight.reshape(embed_dim, K)).
        _check_patch_feature_order(in_chans, patch_size[0], patch_size[1])

        # Pre-pack the projection ONCE for the kernel:
        #   (Kpad, Npad) bf16, K = C*kh*kw zero-padded to a multiple of 128
        #   (lane-dense x loads / weight sublanes), N padded to a multiple of
        #   128 (lane-dense unmasked stores). Zero rows/cols add 0 to the dot.
        K = in_chans * patch_size[0] * patch_size[1]
        self.k = K
        self.k_padded = _round_up(K, 128)
        self.n_padded = _round_up(embed_dim, 128)
        w2d = self.weight.reshape(embed_dim, K).T                      # (K, N)
        w2d = jnp.pad(w2d, ((0, self.k_padded - K),
                            (0, self.n_padded - embed_dim)))
        self.w_packed = w2d.astype(jnp.bfloat16)                       # (Kpad, Npad)
        b2d = jnp.pad(self.bias, (0, self.n_padded - embed_dim))
        self.b_packed = b2d.reshape(1, self.n_padded).astype(jnp.float32)

    def __call__(self, x):
        B, C, H, W = x.shape
        kh, kw = self.patch_size
        p, s = self.padding, self.stride

        # --- glue: im2col in one fused XLA op, NHWC output so the (M, K)
        # reshape is free.  Cast to bf16 early (MXU-native, half the bytes).
        xb = x.astype(jnp.bfloat16)
        patches = lax.conv_general_dilated_patches(
            xb, filter_shape=(kh, kw), window_strides=(s, s),
            padding=[(p, p), (p, p)],
            dimension_numbers=("NCHW", "OIHW", "NHWC"))    # (B, Hp, Wp, K)
        _, Hp, Wp, K = patches.shape
        patches = patches.reshape(B * Hp * Wp, K)           # (M, K), free
        if self.k_padded != K:
            # lane-align K; XLA fuses this pad into the im2col producer.
            patches = jnp.pad(patches, ((0, 0), (0, self.k_padded - K)))

        # --- hot path: Pallas MXU matmul + fused f32 bias ---
        out = _patch_matmul(patches, self.w_packed, self.b_packed,
                            out_dtype=self.out_dtype)       # (M, Npad)
        # No-op when embed_dim % 128 == 0 (all standard ViT dims). For odd
        # dims, prefer keeping Npad-wide tokens and folding the un-pad into
        # the consumer to avoid an extra HBM pass.
        out = out[:, :self.embed_dim]

        tokens = out.reshape(B, Hp * Wp, self.embed_dim)     # flatten(2).T(1,2)
        return tokens, (Hp, Wp)


if __name__ == "__main__":
    key = jax.random.PRNGKey(0)
    kx, kw_, kb = jax.random.split(key, 3)

    # Small shapes consistent with the module: B=2, C=4, 16x16 image,
    # patch=4, embed_dim=32, ratio=1  ->  padding=2, stride=4, Hp=Wp=5.
    B, C, H, W = 2, 4, 16, 16
    patch, embed = 4, 32
    x = jax.random.normal(kx, (B, C, H, W), jnp.float32)

    pe = PatchEmbed(img_size=(H, W), patch_size=patch, in_chans=C,
                    embed_dim=embed, ratio=1, wkey=kw_, bkey=kb)

    tokens, (Hp, Wp) = pe(x)
    tokens = jax.block_until_ready(tokens)

    # Reference: f32 XLA conv with identical semantics (NCHW / OIHW).
    ref = lax.conv_general_dilated(
        x, pe.weight, window_strides=(pe.stride, pe.stride),
        padding=[(pe.padding, pe.padding), (pe.padding, pe.padding)],
        dimension_numbers=("NCHW", "OIHW", "NCHW"))
    ref = ref + pe.bias[None, :, None, None]
    assert (Hp, Wp) == (ref.shape[2], ref.shape[3])
    ref_tokens = ref.reshape(B, embed, Hp * Wp).transpose(0, 2, 1)
    assert tokens.shape == (B, Hp * Wp, embed)
    # bf16 MXU operands (f32 accumulate/bias) vs f32 reference -> loose tol.
    assert jnp.allclose(tokens, ref_tokens, atol=2e-2, rtol=2e-2)

    print("KERNEL_OK")
</pallas_src>

<mosaic_0001>
module attributes {stable_mosaic.version = 11 : i64} {
  func.func @_matmul_bias_kernel(%arg0: i32, %arg1: memref<56x128xbf16, #tpu.memory_space<vmem>>, %arg2: memref<128x128xbf16, #tpu.memory_space<vmem>>, %arg3: memref<1x128xf32, #tpu.memory_space<vmem>>, %arg4: memref<56x128xf32, #tpu.memory_space<vmem>>) attributes {dimension_semantics = [#tpu.dimension_semantics<parallel>], iteration_bounds = array<i64: 1>, scalar_prefetch = 0 : i64, scratch_operands = 0 : i64, tpu.core_type = #tpu.core_type<tc>, window_params = [{transform_indices = @transform_0, window_bounds = array<i64: 56, 128>}, {pipeline_mode = #tpu.pipeline_mode<synchronous>, transform_indices = @transform_1, window_bounds = array<i64: 128, 128>}, {pipeline_mode = #tpu.pipeline_mode<synchronous>, transform_indices = @transform_2, window_bounds = array<i64: 1, 128>}, {transform_indices = @transform_3, window_bounds = array<i64: 56, 128>}]} {
    %c0 = arith.constant 0 : index
    %c0_0 = arith.constant 0 : index
    %0 = vector.load %arg1[%c0, %c0_0] : memref<56x128xbf16, #tpu.memory_space<vmem>>, vector<56x128xbf16>
    %c0_1 = arith.constant 0 : index
    %c0_2 = arith.constant 0 : index
    %1 = vector.load %arg2[%c0_1, %c0_2] : memref<128x128xbf16, #tpu.memory_space<vmem>>, vector<128x128xbf16>
    %cst = arith.constant dense<0.000000e+00> : vector<56x128xf32>
    %2 = tpu.matmul %0, %1, %cst {dimension_numbers = #tpu.dot_dimension_numbers<[1], [0], [0], [1], [0, 0, 1, 1], [], []>} : vector<56x128xbf16>, vector<128x128xbf16>, vector<56x128xf32> -> vector<56x128xf32>
    %c0_3 = arith.constant 0 : index
    %c0_4 = arith.constant 0 : index
    %3 = vector.load %arg3[%c0_3, %c0_4] : memref<1x128xf32, #tpu.memory_space<vmem>>, vector<1x128xf32>
    %4 = vector.broadcast %3 : vector<1x128xf32> to vector<56x128xf32>
    %5 = arith.addf %2, %4 : vector<56x128xf32>
    %c0_5 = arith.constant 0 : index
    %c0_6 = arith.constant 0 : index
    %6 = vector.load %arg4[%c0_5, %c0_6] : memref<56x128xf32, #tpu.memory_space<vmem>>, vector<56x128xf32>
    tpu.vector_store %arg4[%c0_5, %c0_6], %5 {strides = array<i32>} : memref<56x128xf32, #tpu.memory_space<vmem>>, vector<56x128xf32>,
    return
  }
  func.func @transform_0(%arg0: i32) -> (i32, i32) {
    %c0_i32 = arith.constant 0 : i32
    %c0_i32_0 = arith.constant 0 : i32
    return %arg0, %c0_i32 : i32, i32
  }
  func.func @transform_1(%arg0: i32) -> (i32, i32) {
    %c0_i32 = arith.constant 0 : i32
    %c0_i32_0 = arith.constant 0 : i32
    %c0_i32_1 = arith.constant 0 : i32
    return %c0_i32, %c0_i32_0 : i32, i32
  }
  func.func @transform_2(%arg0: i32) -> (i32, i32) {
    %c0_i32 = arith.constant 0 : i32
    %c0_i32_0 = arith.constant 0 : i32
    %c0_i32_1 = arith.constant 0 : i32
    return %c0_i32, %c0_i32_0 : i32, i32
  }
  func.func @transform_3(%arg0: i32) -> (i32, i32) {
    %c0_i32 = arith.constant 0 : i32
    %c0_i32_0 = arith.constant 0 : i32
    return %arg0, %c0_i32 : i32, i32
  }
}

</mosaic_0001>

<llo_original>
// kernel: tpu_custom_call.1
$region0: #{tpu_custom_call.1}
  #allocation0 [shape = 'u32[]', space=smem, size = 0x4, offset = 0x4, fixed_abs, tag = 'smem constant byte address 0x4 - core index']
  #allocation1 [shape = 'u32[144,128]{1,0:T(1,128)}', space=vmem, size = 0x12000, scoped, tag = 'internal scratch']
  %s0 = inlined_call_operand.hbm [shape: bf16[50,128], index: 0, kind: input, shape index: {}]
  %s1 = inlined_call_operand.hbm [shape: bf16[128,128], index: 1, kind: input, shape index: {}]
  %s2 = inlined_call_operand.vmem [shape: f32[1,128], index: 2, kind: input, shape index: {}]
  %s3 = inlined_call_operand.hbm [shape: f32[50,128], index: 3, kind: output, shape index: {}]
  %s4 = sld [smem:[#allocation0]]
  $region30: #{tpu_custom_call.1} parent=0
    _
  %s6 = ssub.s32 1, %s4
  %s7 = scalar_select 0, %s6, %s4
  $region1: #{tpu_custom_call.1} parent=0
    #allocation2 [shape = 'u8[14336]{0}', space=vmem, size = 0x3800, scoped, tag = 'input window, operand 0, single buffered']
    #allocation3 [shape = 's32[1]{0}', space=sflag, size = 0x4, scoped, tag = 'scoped memory for tpu_custom_call.1']
    #allocation4 [shape = 's32[1]{0}', space=sflag, size = 0x4, scoped, tag = 'scoped memory for tpu_custom_call.1']
    #allocation5 [shape = 'u8[32768]{0}', space=vmem, size = 0x8000, scoped, tag = 'input window, operand 1, single buffered']
    #allocation6 [shape = 's32[1]{0}', space=sflag, size = 0x4, scoped, tag = 'scoped memory for tpu_custom_call.1']
    #allocation7 [shape = 'u8[28672]{0}', space=vmem, size = 0x7000, scoped, tag = 'output window, operand 0, single buffered']
    %8 = vsyncpa [#allocation3], 0
    %9 = vsyncpa [#allocation6], 0
    %10 = vsyncpa [#allocation4], 0
    // Predicated region
    $region2: #{tpu_custom_call.1} parent=1 // pred_check
      _
    $region3: #{tpu_custom_call.1} parent=1 // pred_check_branch
      %12 = sbr.rel (0) target = $region5
    $region4: #{tpu_custom_call.1} parent=1 // pred_region
      %s14 = ssub.s32 448, 448
      %15 = vsyncadd [#allocation3], %s14
      %s16 = sshll.u32 [#allocation2], 4
      %s17 = int_to_ptr.vmem [resolvable:$true] %s16
      %22 = dma.hbm_to_vmem [thread:$0]  %s0, 448, %s17, [#allocation3], 64, 64, 4
    $region5: #{tpu_custom_call.1} parent=1 // pred_fallthru
      _
    // Predicated region
    $region6: #{tpu_custom_call.1} parent=1 // pred_check
      _
    $region7: #{tpu_custom_call.1} parent=1 // pred_check_branch
      %24 = sbr.rel (0) target = $region9
    $region8: #{tpu_custom_call.1} parent=1 // pred_region
      %s26 = ssub.s32 1024, 1024
      %27 = vsyncadd [#allocation6], %s26
      %s28 = sshll.u32 [#allocation5], 4
      %s29 = int_to_ptr.vmem [resolvable:$true] %s28
      %34 = dma.hbm_to_vmem [thread:$0]  %s1, 1024, %s29, [#allocation6], 64, 64, 4
    $region9: #{tpu_custom_call.1} parent=1 // pred_fallthru
      _
    // Predicated region
    $region10: #{tpu_custom_call.1} parent=1 // pred_check
      _
    $region11: #{tpu_custom_call.1} parent=1 // pred_check_branch
      %36 = sbr.rel (0) target = $region13
    $region12: #{tpu_custom_call.1} parent=1 // pred_region
      _
    $region13: #{tpu_custom_call.1} parent=1 // pred_fallthru
      _
    // Predicated region
    $region14: #{tpu_custom_call.1} parent=1 // pred_check
      _
    $region15: #{tpu_custom_call.1} parent=1 // pred_check_branch
      %38 = sbr.rel (0) target = $region17
    $region16: #{tpu_custom_call.1} parent=1 // pred_region
      %39 = dma.done [#allocation3], 448
    $region17: #{tpu_custom_call.1} parent=1 // pred_fallthru
      _
    // Predicated region
    $region18: #{tpu_custom_call.1} parent=1 // pred_check
      _
    $region19: #{tpu_custom_call.1} parent=1 // pred_check_branch
      %41 = sbr.rel (0) target = $region21
    $region20: #{tpu_custom_call.1} parent=1 // pred_region
      %42 = dma.done [#allocation6], 1024
    $region21: #{tpu_custom_call.1} parent=1 // pred_fallthru
      _
    %v44 = vld [vmem:[#allocation2] sm:$0xf]
    %v45 = vld [vmem:[#allocation2 + $0x4] sm:$0xf]
    %v46 = vld [vmem:[#allocation2 + $0x8] sm:$0xf]
    %v47 = vld [vmem:[#allocation2 + $0xc] sm:$0xf]
    %v48 = vld [vmem:[#allocation2 + $0x10] sm:$0xf]
    %v49 = vld [vmem:[#allocation2 + $0x14] sm:$0xf]
    %v50 = vld [vmem:[#allocation2 + $0x18] sm:$0xf]
    %v51 = vld [vmem:[#allocation5] sm:$0xf]
    %v52 = vld [vmem:[#allocation5 + $0x4] sm:$0xf]
    %v53 = vld [vmem:[#allocation5 + $0x8] sm:$0xf]
    %v54 = vld [vmem:[#allocation5 + $0xc] sm:$0xf]
    %v55 = vld [vmem:[#allocation5 + $0x10] sm:$0xf]
    %v56 = vld [vmem:[#allocation5 + $0x14] sm:$0xf]
    %v57 = vld [vmem:[#allocation5 + $0x18] sm:$0xf]
    %v58 = vld [vmem:[#allocation5 + $0x1c] sm:$0xf]
    %v59 = vld [vmem:[#allocation5 + $0x20] sm:$0xf]
    %v60 = vld [vmem:[#allocation5 + $0x24] sm:$0xf]
    %v61 = vld [vmem:[#allocation5 + $0x28] sm:$0xf]
    %v62 = vld [vmem:[#allocation5 + $0x2c] sm:$0xf]
    %v63 = vld [vmem:[#allocation5 + $0x30] sm:$0xf]
    %v64 = vld [vmem:[#allocation5 + $0x34] sm:$0xf]
    %v65 = vld [vmem:[#allocation5 + $0x38] sm:$0xf]
    %v66 = vld [vmem:[#allocation5 + $0x3c] sm:$0xf]
    %v67 = vld [vmem:[%s2] sm:$0x1]
    %v69 = vlaneseq
    %v70 = vshrl.u32 %v69, 7
    %v71 = vsub.s32 0, %v70
    %v72 = vrot.slane %v67, %v71
    %v81 = vunpack.c.l.b16 %v44
    %v82 = vunpack.c.l.b16 %v45
    %v83 = vunpack.c.l.b16 %v46
    %v84 = vunpack.c.l.b16 %v47
    %v85 = vunpack.c.l.b16 %v48
    %v86 = vunpack.c.l.b16 %v49
    %v87 = vunpack.c.l.b16 %v50
    %v88 = vpack.c.b16 %v82, %v81
    %v89 = vpack.c.b16 %v84, %v83
    %v90 = vpack.c.b16 %v86, %v85
    %v91 = vpack.c.b16 %v87, %v87
    %v112 = vunpack.c.l.b16 %v51
    %v113 = vunpack.c.l.b16 %v52
    %v114 = vunpack.c.l.b16 %v53
    %v115 = vunpack.c.l.b16 %v54
    %v116 = vunpack.c.l.b16 %v55
    %v117 = vunpack.c.l.b16 %v56
    %v118 = vunpack.c.l.b16 %v57
    %v119 = vunpack.c.l.b16 %v58
    %v120 = vunpack.c.l.b16 %v59
    %v121 = vunpack.c.l.b16 %v60
    %v122 = vunpack.c.l.b16 %v61
    %v123 = vunpack.c.l.b16 %v62
    %v124 = vunpack.c.l.b16 %v63
    %v125 = vunpack.c.l.b16 %v64
    %v126 = vunpack.c.l.b16 %v65
    %v127 = vunpack.c.l.b16 %v66
    %v128 = vpack.c.b16 %v113, %v112
    %v129 = vpack.c.b16 %v115, %v114
    %v130 = vpack.c.b16 %v117, %v116
    %v131 = vpack.c.b16 %v119, %v118
    %v132 = vpack.c.b16 %v121, %v120
    %v133 = vpack.c.b16 %v123, %v122
    %v134 = vpack.c.b16 %v125, %v124
    %v135 = vpack.c.b16 %v127, %v126
    %144 = vmatprep.subr.bf16.mxu0 0
    %145 = vmatpush1.bf16.msra.mxu0 %v128
    %146 = vmatprep.subr.bf16.mxu0 0
    %147 = vmatpush1.bf16.msra.mxu0 %v129
    %148 = vmatprep.subr.bf16.mxu0 0
    %149 = vmatpush1.bf16.msra.mxu0 %v130
    %150 = vmatprep.subr.bf16.mxu0 0
    %151 = vmatpush1.bf16.msra.mxu0 %v131
    %152 = vmatprep.subr.bf16.mxu0 0
    %153 = vmatpush1.bf16.msra.mxu0 %v132
    %154 = vmatprep.subr.bf16.mxu0 0
    %155 = vmatpush1.bf16.msra.mxu0 %v133
    %156 = vmatprep.subr.bf16.mxu0 0
    %157 = vmatpush1.bf16.msra.mxu0 %v134
    %158 = vmatprep.subr.bf16.mxu0 0
    %159 = vmatpush1.bf16.msra.mxu0 %v135
    %160 = vmatprep.subr.bf16.mxu0 0
    %161 = vmatpush1.bf16.msra.mxu0 0
    %162 = vmatprep.subr.bf16.mxu0 0
    %163 = vmatpush1.bf16.msra.mxu0 0
    %164 = vmatprep.subr.bf16.mxu0 0
    %165 = vmatpush1.bf16.msra.mxu0 0
    %166 = vmatprep.subr.bf16.mxu0 0
    %167 = vmatpush1.bf16.msra.mxu0 0
    %168 = vmatprep.subr.bf16.mxu0 0
    %169 = vmatpush1.bf16.msra.mxu0 0
    %170 = vmatprep.subr.bf16.mxu0 0
    %171 = vmatpush1.bf16.msra.mxu0 0
    %172 = vmatprep.subr.bf16.mxu0 0
    %173 = vmatpush1.bf16.msra.mxu0 0
    %174 = vmatprep.subr.bf16.mxu0 0
    %175 = vmatpush1.bf16.msra.mxu0 0
    %176 = vmatprep.mubr.bf16.mxu0 0
    %177 = vmatmul.mubr.bf16.gmra.mrb[0].mxu0 %v88
    %v178 = vpop.f32.mrb[0].mxu0
    %v179 = vadd.f32 %v72, %v178
    %v180 = vpop.f32.mrb[0].mxu0
    %v181 = vpop.f32.mrb[0].mxu0
    %v182 = vadd.f32 %v72, %v181
    %v183 = vpop.f32.mrb[0].mxu0
    %184 = vmatprep.mubr.bf16.mxu0 0
    %185 = vmatmul.mubr.bf16.gmra.mrb[0].mxu0 %v89
    %v186 = vpop.f32.mrb[0].mxu0
    %v187 = vadd.f32 %v72, %v186
    %v188 = vpop.f32.mrb[0].mxu0
    %v189 = vpop.f32.mrb[0].mxu0
    %v190 = vadd.f32 %v72, %v189
    %v191 = vpop.f32.mrb[0].mxu0
    %192 = vmatprep.mubr.bf16.mxu0 0
    %193 = vmatmul.mubr.bf16.gmra.mrb[0].mxu0 %v90
    %v194 = vpop.f32.mrb[0].mxu0
    %v195 = vadd.f32 %v72, %v194
    %v196 = vpop.f32.mrb[0].mxu0
    %v197 = vpop.f32.mrb[0].mxu0
    %v198 = vadd.f32 %v72, %v197
    %v199 = vpop.f32.mrb[0].mxu0
    %200 = vmatprep.mubr.bf16.mxu0 0
    %201 = vmatmul.mubr.bf16.gmra.mrb[0].mxu0 %v91
    %v202 = vpop.f32.mrb[0].mxu0
    %v203 = vadd.f32 %v72, %v202
    %v204 = vpop.f32.mrb[0].mxu0
    %v205 = vpop.f32.mrb[0].mxu0
    %v206 = vpop.f32.mrb[0].mxu0
    %207 = vdwg.mxu0
    %208 = vst [vmem:[#allocation7] sm:$0xff] %v179
    %209 = vst [vmem:[#allocation7 + $0x8] sm:$0xff] %v182
    %210 = vst [vmem:[#allocation7 + $0x10] sm:$0xff] %v187
    %211 = vst [vmem:[#allocation7 + $0x18] sm:$0xff] %v190
    %212 = vst [vmem:[#allocation7 + $0x20] sm:$0xff] %v195
    %213 = vst [vmem:[#allocation7 + $0x28] sm:$0xff] %v198
    %214 = vst [vmem:[#allocation7 + $0x30] sm:$0xff] %v203
    // Predicated region
    $region22: #{tpu_custom_call.1} parent=1 // pred_check
      _
    $region23: #{tpu_custom_call.1} parent=1 // pred_check_branch
      %216 = sbr.rel (0) target = $region25
    $region24: #{tpu_custom_call.1} parent=1 // pred_region
      %s218 = ssub.s32 896, 896
      %219 = vsyncadd [#allocation4], %s218
      %s220 = sshll.u32 [#allocation7], 4
      %s221 = int_to_ptr.vmem [resolvable:$true] %s220
      %226 = dma.vmem_to_hbm [thread:$0]  %s221, 896, %s3, [#allocation4], 128, 128, 8
    $region25: #{tpu_custom_call.1} parent=1 // pred_fallthru
      _
    // Predicated region
    $region26: #{tpu_custom_call.1} parent=1 // pred_check
      _
    $region27: #{tpu_custom_call.1} parent=1 // pred_check_branch
      %228 = sbr.rel (0) target = $region29
    $region28: #{tpu_custom_call.1} parent=1 // pred_region
      %229 = dma.done [#allocation4], 896
    $region29: #{tpu_custom_call.1} parent=1 // pred_fallthru
      _
    %230 = vsyncpa [#allocation3], 1
    %231 = vsyncpa [#allocation6], 1
    %232 = vsyncpa [#allocation4], 1

</llo_original>
